<compile_context>
chip_gen: v7x
topology: tpu7x:2x2x1
jax: 0.10.0
libtpu: 0.0.40
codegen_flags: <defaults>
</compile_context>

<pallas_src>
import functools

import jax
import jax.numpy as jnp
from jax.experimental import pallas as pl
from jax.experimental.pallas import tpu as pltpu


_TARGET_BYTES_PER_BUFFER = 4 * 1024 * 1024  # per pipeline buffer (x2 double-buffered)


def _choose_tile_bc(bc: int, hw: int, in_itemsize: int, out_itemsize: int) -> int:
    """Rows per grid step.

    Budgets both the input tile (rows * HW * in_itemsize) and the lane-padded
    output tile (rows * 128 * out_itemsize) against ~4 MiB per pipeline buffer,
    and prefers a tile that divides BC exactly (no ragged last block).  A
    ragged grid is still correct (reductions are strictly per-row and Pallas
    drops out-of-bounds rows of the final partial output block); it is only a
    fallback for awkward BC.
    """
    per_row_bytes = hw * in_itemsize + 128 * out_itemsize
    rows = int(_TARGET_BYTES_PER_BUFFER // max(1, per_row_bytes))
    if rows >= bc:
        return bc  # whole row axis fits in one comfortably sized tile
    step = 128 if rows >= 128 else 8  # sublane/lane-friendly granularity
    tile = max(step, (rows // step) * step)
    # Prefer an exact divisor of BC within 2x of the target tile size.
    for cand in range(tile, max(step, tile // 2) - 1, -step):
        if cand > 0 and bc % cand == 0:
            return cand
    return min(tile, bc)  # ragged last block (see docstring)


def _concat_pool_kernel(x_ref, out_ref, *, inv_hw: float):
    # x_ref: (TILE_BC, HW) tile in VMEM; reduce over the lane (spatial) axis.
    x = x_ref[...]
    # Max in the native dtype (no full-tile f32 copy -> lower vreg pressure for
    # bf16 inputs); mean as an f32 row-sum times a precomputed 1/HW (no
    # per-row divide).
    mx = jnp.max(x, axis=-1, keepdims=True)                                # (TILE_BC, 1)
    mean = jnp.sum(x, axis=-1, dtype=jnp.float32, keepdims=True) * inv_hw  # (TILE_BC, 1)
    # One fused store: column 0 = max, column 1 = mean.
    out_ref[...] = jnp.concatenate(
        [mx.astype(out_ref.dtype), mean.astype(out_ref.dtype)], axis=-1)


def adaptive_concat_pool2d(x):
    """x: (B, C, H, W) -> (B, 2C, 1, 1); max-pooled channels first, then avg."""
    B, C, H, W = x.shape
    BC, HW = B * C, H * W
    xr = x.reshape(BC, HW)

    out_dtype = x.dtype
    out_itemsize = jnp.dtype(out_dtype).itemsize
    tile_bc = _choose_tile_bc(BC, HW, x.dtype.itemsize, out_itemsize)
    grid = (pl.cdiv(BC, tile_bc),)

    # VMEM budget: double-buffered input tile + lane-padded (tile_bc, 128)
    # output tile, plus slack.  Floor of 32 MiB lifts v5e's 16 MiB default;
    # the dynamic term only matters for pathologically large HW.
    per_row_bytes = HW * x.dtype.itemsize + 128 * out_itemsize
    vmem_limit = max(32 * 1024 * 1024, 2 * tile_bc * per_row_bytes + (2 << 20))

    out = pl.pallas_call(
        functools.partial(_concat_pool_kernel, inv_hw=1.0 / HW),
        out_shape=jax.ShapeDtypeStruct((BC, 2), out_dtype),
        grid=grid,
        in_specs=[pl.BlockSpec((tile_bc, HW), lambda i: (i, 0))],
        out_specs=pl.BlockSpec((tile_bc, 2), lambda i: (i, 0)),
        compiler_params=pltpu.CompilerParams(
            # Row tiles are independent -> shard across both TCs on v7x.
            dimension_semantics=("parallel",),
            vmem_limit_bytes=vmem_limit,
        ),
    )(xr)

    # Tiny (BC, 2) epilogue to reorder into torch's channel layout; it is
    # ~HW/2x smaller than the input the kernel already streamed, so it is
    # negligible and fuses into one small XLA op.
    maxp = out[:, 0].reshape(B, C, 1, 1)
    avgp = out[:, 1].reshape(B, C, 1, 1)
    return jnp.concatenate([maxp, avgp], axis=1)


if __name__ == "__main__":
    key = jax.random.PRNGKey(0)

    def _reference(x):
        # Mirrors torch.cat([max_pool(x), avg_pool(x)], dim=1).
        return jnp.concatenate(
            [
                jnp.max(x, axis=(2, 3), keepdims=True),
                jnp.mean(x, axis=(2, 3), keepdims=True),
            ],
            axis=1,
        )

    # Small shape consistent with the module (single-tile path).
    B, C, H, W = 2, 4, 16, 16
    x = jax.random.normal(key, (B, C, H, W), dtype=jnp.float32)
    out = adaptive_concat_pool2d(x)
    jax.block_until_ready(out)
    assert out.shape == (B, 2 * C, 1, 1), out.shape
    assert jnp.allclose(out, _reference(x), atol=1e-5, rtol=1e-5), "mismatch vs reference"

    # Multi-tile path: BC = 8192 -> tile 2048 rows, grid = (4,), parallel axis.
    k2 = jax.random.fold_in(key, 1)
    B2, C2, H2, W2 = 2, 4096, 16, 16
    x2 = jax.random.normal(k2, (B2, C2, H2, W2), dtype=jnp.float32)
    out2 = adaptive_concat_pool2d(x2)
    jax.block_until_ready(out2)
    assert out2.shape == (B2, 2 * C2, 1, 1), out2.shape
    assert jnp.allclose(out2, _reference(x2), atol=1e-5, rtol=1e-5), "mismatch vs reference (tiled)"

    print("KERNEL_OK")
</pallas_src>

<mosaic_0001>
module attributes {stable_mosaic.version = 11 : i64} {
  func.func @_concat_pool_kernel(%arg0: i32, %arg1: memref<8x256xf32, #tpu.memory_space<vmem>>, %arg2: memref<8x2xf32, #tpu.memory_space<vmem>>) attributes {dimension_semantics = [#tpu.dimension_semantics<parallel>], iteration_bounds = array<i64: 1>, scalar_prefetch = 0 : i64, scratch_operands = 0 : i64, tpu.core_type = #tpu.core_type<tc>, window_params = [{transform_indices = @transform_0, window_bounds = array<i64: 8, 256>}, {transform_indices = @transform_1, window_bounds = array<i64: 8, 2>}]} {
    %c0 = arith.constant 0 : index
    %c0_0 = arith.constant 0 : index
    %0 = vector.load %arg1[%c0, %c0_0] : memref<8x256xf32, #tpu.memory_space<vmem>>, vector<8x256xf32>
    %cst = arith.constant dense<0xFF800000> : vector<8xf32>
    %1 = vector.multi_reduction <maximumf>, %0, %cst [1] : vector<8x256xf32> to vector<8xf32>
    %2 = vector.shape_cast %1 : vector<8xf32> to vector<8x1xf32>
    %cst_1 = arith.constant dense<0.000000e+00> : vector<8xf32>
    %3 = vector.multi_reduction <add>, %0, %cst_1 [1] : vector<8x256xf32> to vector<8xf32>
    %4 = vector.shape_cast %3 : vector<8xf32> to vector<8x1xf32>
    %cst_2 = arith.constant 3.906250e-03 : f32
    %5 = vector.broadcast %cst_2 : f32 to vector<8x1xf32>
    %6 = arith.mulf %4, %5 : vector<8x1xf32>
    %7 = tpu.concatenate %2, %6 in 1 : vector<8x1xf32>, vector<8x1xf32> -> vector<8x2xf32>
    %c0_3 = arith.constant 0 : index
    %c0_4 = arith.constant 0 : index
    %8 = vector.load %arg2[%c0_3, %c0_4] : memref<8x2xf32, #tpu.memory_space<vmem>>, vector<8x2xf32>
    tpu.vector_store %arg2[%c0_3, %c0_4], %7 {strides = array<i32>} : memref<8x2xf32, #tpu.memory_space<vmem>>, vector<8x2xf32>,
    return
  }
  func.func @transform_0(%arg0: i32) -> (i32, i32) {
    %c0_i32 = arith.constant 0 : i32
    %c0_i32_0 = arith.constant 0 : i32
    return %arg0, %c0_i32 : i32, i32
  }
  func.func @transform_1(%arg0: i32) -> (i32, i32) {
    %c0_i32 = arith.constant 0 : i32
    %c0_i32_0 = arith.constant 0 : i32
    return %arg0, %c0_i32 : i32, i32
  }
}

</mosaic_0001>

<llo_original>
// kernel: tpu_custom_call.1
$region0: #{tpu_custom_call.1}
  #allocation0 [shape = 'u32[]', space=smem, size = 0x4, offset = 0x4, fixed_abs, tag = 'smem constant byte address 0x4 - core index']
  #allocation1 [shape = 'u32[144,128]{1,0:T(1,128)}', space=vmem, size = 0x12000, scoped, tag = 'internal scratch']
  %s0 = inlined_call_operand.hbm [shape: f32[8,256], index: 0, kind: input, shape index: {}]
  %s1 = inlined_call_operand.vmem [shape: f32[8,2], index: 1, kind: output, shape index: {}]
  %s2 = sld [smem:[#allocation0]]
  $region18: #{tpu_custom_call.1} parent=0
    _
  %s4 = ssub.s32 1, %s2
  %s5 = scalar_select 0, %s4, %s2
  $region1: #{tpu_custom_call.1} parent=0
    #allocation2 [shape = 'u8[8192]{0}', space=vmem, size = 0x2000, scoped, tag = 'input window, operand 0, single buffered']
    #allocation3 [shape = 's32[1]{0}', space=sflag, size = 0x4, scoped, tag = 'scoped memory for tpu_custom_call.1']
    %6 = vsyncpa [#allocation3], 0
    // Predicated region
    $region2: #{tpu_custom_call.1} parent=1 // pred_check
      _
    $region3: #{tpu_custom_call.1} parent=1 // pred_check_branch
      %8 = sbr.rel (0) target = $region5
    $region4: #{tpu_custom_call.1} parent=1 // pred_region
      %s10 = ssub.s32 256, 256
      %11 = vsyncadd [#allocation3], %s10
      %s13 = sshll.u32 [#allocation2], 4
      %s14 = int_to_ptr.vmem [resolvable:$true] %s13
      %16 = dma.hbm_to_vmem [thread:$0]  %s0, 256, %s14, [#allocation3]
    $region5: #{tpu_custom_call.1} parent=1 // pred_fallthru
      _
    // Predicated region
    $region6: #{tpu_custom_call.1} parent=1 // pred_check
      _
    $region7: #{tpu_custom_call.1} parent=1 // pred_check_branch
      %18 = sbr.rel (0) target = $region9
    $region8: #{tpu_custom_call.1} parent=1 // pred_region
      %19 = dma.done [#allocation3], 256
    $region9: #{tpu_custom_call.1} parent=1 // pred_fallthru
      _
    %v20 = vld [vmem:[#allocation2] sm:$0xff]
    %v21 = vld [vmem:[#allocation2 + $0x8] sm:$0xff]
    %v22 = vmax.f32 %v20, %v21
    %23 = vmax.xlane.f32.xlu0 %v22
    %v24 = vpop.xlane.xlu0 %23
    %v25 = vadd.f32 %v20, %v21
    %26 = vadd.xlane.f32.xlu0 %v25
    %v27 = vpop.xlane.xlu0 %26
    %v28 = vmul.f32 %v27, 0.00390625
    %vm29 = vcmask 7168
    %v30 = vsel %vm29, %v24, %v28
    %vm31 = vcmask 15360
    %32 = vst.msk [vmem:[%s1] sm:$0xff] %vm31, %v30
    // Predicated region
    $region10: #{tpu_custom_call.1} parent=1 // pred_check
      _
    $region11: #{tpu_custom_call.1} parent=1 // pred_check_branch
      %34 = sbr.rel (0) target = $region13
    $region12: #{tpu_custom_call.1} parent=1 // pred_region
      _
    $region13: #{tpu_custom_call.1} parent=1 // pred_fallthru
      _
    // Predicated region
    $region14: #{tpu_custom_call.1} parent=1 // pred_check
      _
    $region15: #{tpu_custom_call.1} parent=1 // pred_check_branch
      %36 = sbr.rel (0) target = $region17
    $region16: #{tpu_custom_call.1} parent=1 // pred_region
      _
    $region17: #{tpu_custom_call.1} parent=1 // pred_fallthru
      _
    %37 = vsyncpa [#allocation3], 1

</llo_original>
